<compile_context>
chip_gen: v7x
topology: tpu7x:2x2x1
jax: 0.10.0
libtpu: 0.0.40
codegen_flags: <defaults>
</compile_context>

<pallas_src>
import functools

import jax
import jax.numpy as jnp
from jax.experimental import pallas as pl
from jax.experimental.pallas import tpu as pltpu

_MAX_CHUNKS = 16                 # static unroll bound for the DMA issue loop
_TARGET_CHUNK_BYTES = 16 << 20   # ~16 MiB per DMA chunk


def _dma_copy_kernel(x_hbm, o_hbm, sem, *, chunks):
    """Copy the (N, F) view HBM->HBM in large chunks, <= 2 DMAs in flight."""
    cps = []
    for i, (start, rows) in enumerate(chunks):
        cp = pltpu.make_async_copy(
            x_hbm.at[pl.ds(start, rows), :],
            o_hbm.at[pl.ds(start, rows), :],
            sem.at[i % 2],
        )
        if i >= 2:
            cps[i - 2].wait()      # free this semaphore slot before reuse
        cp.start()
        cps.append(cp)
    # Drain the (up to 2) copies still in flight.
    for cp in cps[max(0, len(cps) - 2):]:
        cp.wait()


def flatten(x):
    """Pallas equivalent of Flatten.forward: (N, ...) -> (N, prod(...))."""
    n = x.shape[0]
    feat = 1
    for d in x.shape[1:]:
        feat *= d

    # Metadata-only row-major reshape (identical element ordering to
    # torch .view on a contiguous tensor).  Kernel only sees the 2-D view.
    x2 = jnp.reshape(x, (n, feat))

    itemsize = jnp.dtype(x.dtype).itemsize
    total_bytes = n * feat * itemsize

    # A handful of large, statically-shaped row chunks (ragged tail allowed).
    n_chunks = max(
        1, min(n, _MAX_CHUNKS, pl.cdiv(total_bytes, _TARGET_CHUNK_BYTES))
    )
    chunk_rows = pl.cdiv(n, n_chunks)
    chunks = tuple(
        (s, min(chunk_rows, n - s)) for s in range(0, n, chunk_rows)
    )

    kernel = functools.partial(_dma_copy_kernel, chunks=chunks)

    return pl.pallas_call(
        kernel,
        out_shape=jax.ShapeDtypeStruct((n, feat), x.dtype),
        in_specs=[pl.BlockSpec(memory_space=pl.ANY)],
        out_specs=pl.BlockSpec(memory_space=pl.ANY),
        scratch_shapes=[pltpu.SemaphoreType.DMA((2,))],
        cost_estimate=pl.CostEstimate(
            flops=0, transcendentals=0, bytes_accessed=2 * total_bytes
        ),
    )(x2)


if __name__ == "__main__":
    key = jax.random.PRNGKey(0)
    # Small NCHW input consistent with the module's typical conv-feature input.
    x = jax.random.normal(key, (2, 4, 16, 16), dtype=jnp.float32)

    y = flatten(x)
    y = jax.block_until_ready(y)

    # Reference: pure-JAX reshape (exactly what torch .view(-1, prod) does).
    y_ref = x.reshape(x.shape[0], -1)
    assert y.shape == (2, 4 * 16 * 16), y.shape
    assert y.dtype == x.dtype
    assert jnp.array_equal(y, y_ref)

    print("KERNEL_OK")
</pallas_src>

<mosaic_0001>
module attributes {stable_mosaic.version = 11 : i64} {
  func.func @_dma_copy_kernel(%arg0: memref<2x1024xf32, #tpu.memory_space<any>>, %arg1: memref<2x1024xf32, #tpu.memory_space<any>>, %arg2: memref<2x!tpu.dma_semaphore, #tpu.memory_space<semaphore_mem>>) attributes {dimension_semantics = [], scalar_prefetch = 0 : i64, scratch_operands = 1 : i64, tpu.core_type = #tpu.core_type<tc>} {
    %c0_i32 = arith.constant 0 : i32
    %c0_i32_0 = arith.constant 0 : i32
    %c0_i32_1 = arith.constant 0 : i32
    %0 = tpu.memref_slice %arg0[%c0_i32_0, %c0_i32_1] : memref<2x1024xf32, #tpu.memory_space<any>> -> memref<2x1024xf32, #tpu.memory_space<any>>
    %c0_i32_2 = arith.constant 0 : i32
    %c0_i32_3 = arith.constant 0 : i32
    %1 = tpu.memref_slice %arg1[%c0_i32_2, %c0_i32_3] : memref<2x1024xf32, #tpu.memory_space<any>> -> memref<2x1024xf32, #tpu.memory_space<any>>
    %2 = tpu.memref_slice %arg2[%c0_i32] : memref<2x!tpu.dma_semaphore, #tpu.memory_space<semaphore_mem>> -> memref<1x!tpu.dma_semaphore, #tpu.memory_space<semaphore_mem>>
    %3 = tpu.memref_squeeze %2 : memref<1x!tpu.dma_semaphore, #tpu.memory_space<semaphore_mem>> -> memref<!tpu.dma_semaphore, #tpu.memory_space<semaphore_mem>>
    tpu.enqueue_dma source(%0 : memref<2x1024xf32, #tpu.memory_space<any>>) target(%1 : memref<2x1024xf32, #tpu.memory_space<any>>) target_semaphore(%3 : memref<!tpu.dma_semaphore, #tpu.memory_space<semaphore_mem>>)
    %c0_i32_4 = arith.constant 0 : i32
    %c0_i32_5 = arith.constant 0 : i32
    %c0_i32_6 = arith.constant 0 : i32
    %4 = tpu.memref_slice %arg0[%c0_i32_5, %c0_i32_6] : memref<2x1024xf32, #tpu.memory_space<any>> -> memref<2x1024xf32, #tpu.memory_space<any>>
    %c0_i32_7 = arith.constant 0 : i32
    %c0_i32_8 = arith.constant 0 : i32
    %5 = tpu.memref_slice %arg1[%c0_i32_7, %c0_i32_8] : memref<2x1024xf32, #tpu.memory_space<any>> -> memref<2x1024xf32, #tpu.memory_space<any>>
    %6 = tpu.memref_slice %arg2[%c0_i32_4] : memref<2x!tpu.dma_semaphore, #tpu.memory_space<semaphore_mem>> -> memref<1x!tpu.dma_semaphore, #tpu.memory_space<semaphore_mem>>
    %7 = tpu.memref_squeeze %6 : memref<1x!tpu.dma_semaphore, #tpu.memory_space<semaphore_mem>> -> memref<!tpu.dma_semaphore, #tpu.memory_space<semaphore_mem>>
    tpu.wait_dma2 semaphore(%7 : memref<!tpu.dma_semaphore, #tpu.memory_space<semaphore_mem>>) src(%4 : memref<2x1024xf32, #tpu.memory_space<any>>) dst(%5 : memref<2x1024xf32, #tpu.memory_space<any>>)
    return
  }
}

</mosaic_0001>

<llo_original>
// kernel: tpu_custom_call.1
$region0: #{tpu_custom_call.1}
  #allocation0 [shape = 'u32[]', space=smem, size = 0x4, offset = 0x4, fixed_abs, tag = 'smem constant byte address 0x4 - core index']
  #allocation1 [shape = 'u32[144,128]{1,0:T(1,128)}', space=vmem, size = 0x12000, scoped, tag = 'internal scratch']
  #allocation2 [shape = 's32[2]{0}', space=sflag, size = 0x8, scoped, tag = 'scratch operand']
  #allocation3 [shape = 's32[]', space=sflag, size = 0x4, offset = 0, fixed_abs, tag = 'sflag constant byte address 0x0 - dummy sync flag']
  #allocation4 [shape = 'u32[0]{0}', space=smem, size = 0, offset = 0, fixed_abs, tag = 'smem constant byte address 0x0 - null']
  %s0 = inlined_call_operand.hbm [shape: f32[2,1024], index: 0, kind: input, shape index: {}]
  %s1 = inlined_call_operand.hbm [shape: f32[2,1024], index: 1, kind: output, shape index: {}]
  %s2 = sld [smem:[#allocation0]]
  $region2: #{tpu_custom_call.1} parent=0
    _
  %s4 = ssub.s32 1, %s2
  %s5 = scalar_select 0, %s4, %s2
  %s7 = sshll.u32 1, 14
  %s8 = sxor.u32 4294967295, %s7
  %s11 = sshll.u32 3, 24
  %s12 = sxor.u32 4294967295, %s11
  %s13 = sand.u32 0, %s12
  %s15 = sor.u32 %s13, 0
  %18 = dma.general %s0, 256, %s1, [#allocation2], [#allocation3], [#allocation4], %s15, 0
  %s19 = smul.u32 2, 1
  %s20 = smul.u32 %s19, 8
  %s21 = sshll.u32 %s20, 4
  %22 = dma.done [#allocation2], %s21
  %23 = vsyncmov [#allocation2]
  %s24 = vpop.sfrf %23
  %p25 = scmp.eq.s32.totalorder %s24, 0
  %p26 = pneg %p25
  %28 = shalt.err (%p26)
  %s29 = scalar_lea.sflag [#allocation2], 1
  %30 = vsyncmov %s29
  %s31 = vpop.sfrf %30
  %p32 = scmp.eq.s32.totalorder %s31, 0
  %p33 = pneg %p32
  %35 = shalt.err (%p33)

</llo_original>
